<compile_context>
chip_gen: v7x
topology: tpu7x:2x2x1
jax: 0.10.0
libtpu: 0.0.40
codegen_flags: <defaults>
</compile_context>

<pallas_src>
import numpy as np
import jax
import jax.numpy as jnp
from jax.experimental import pallas as pl
from jax.experimental.pallas import tpu as pltpu


# ----------------------------- parameter setup ------------------------------

def get_wiener_matrix(psf, gamma, centre_roll=True):
    """JAX port of the PyTorch get_wiener_matrix (parameter initialization)."""
    if centre_roll:
        for dim in range(2):
            psf = jnp.roll(psf, -(psf.shape[dim] // 2), axis=dim)
    H = jnp.fft.fft2(psf[None])
    habsq = H * jnp.conj(H)
    W = jnp.conj(H) / (habsq.real + gamma)
    return jnp.fft.ifft2(W).real[0]


def _build_fused_operator(wiener_crop, mask, normalizer, H, W, cx, cy):
    """Real (H*W, H*W) operator M with  out_flat = x_flat @ M  equal to
    normalizer * Re(ifft2(fft2(x * mask) * fft2(padded/rolled wiener)))."""
    pad_x, pad_y = H - cx, W - cy
    fft_layer = jnp.pad(wiener_crop,
                        ((pad_x // 2, pad_x // 2), (pad_y // 2, pad_y // 2)))
    for dim in range(2):
        fft_layer = jnp.roll(fft_layer, -(fft_layer.shape[dim] // 2), axis=dim)
    K = jnp.fft.fft2(fft_layer)                        # Wiener-kernel spectrum

    # Apply the (linear) pipeline to the canonical basis of (H, W) images.
    basis = jnp.eye(H * W, dtype=jnp.float32).reshape(H * W, H, W)
    resp = jnp.fft.ifft2(jnp.fft.fft2(basis * mask[None]) * K[None]).real
    M = (resp * jnp.float32(normalizer)).reshape(H * W, H * W)
    return M.astype(jnp.float32)


# ------------------------------- Pallas kernel -------------------------------

def fused_fft_conv_kernel(x_ref, op_ref, o_ref):
    # One MXU matmul per grid step: (TB, H*W) @ (H*W, H*W) -> (TB, H*W).
    o_ref[...] = jnp.dot(x_ref[...], op_ref[...],
                         preferred_element_type=jnp.float32)


# ------------------------------ forward wrapper -------------------------------

def fft_layer_forward(img, wiener_crop, mask, normalizer, args):
    H, W = args["psf_height"], args["psf_width"]
    cx, cy = args["psf_crop_size_x"], args["psf_crop_size_y"]
    img_h, img_w = args["image_height"], args["image_width"]
    pad_x, pad_y = H - cx, W - cy

    # Fused linear operator (mask + DFT + Wiener + iDFT + normalizer).
    M = _build_fused_operator(wiener_crop, mask.astype(jnp.float32),
                              normalizer, H, W, cx, cy)

    # Image preprocessing glue: scale, centre-crop, zero-pad (torch F.pad semantics).
    x = 0.5 * img + 0.5
    b, c, h, w = x.shape
    x = x[:, :, (h - cx) // 2:(h + cx) // 2, (w - cy) // 2:(w + cy) // 2]
    x = jnp.pad(x, ((0, 0), (0, 0),
                    (pad_x // 2, pad_x // 2), (pad_y // 2, pad_y // 2)))
    x = x.reshape(b * c, H * W).astype(jnp.float32)    # lane-dense flat images

    rows = b * c
    TB = min(256, ((rows + 7) // 8) * 8)               # row tile, multiple of 8
    rows_pad = ((rows + TB - 1) // TB) * TB
    if rows_pad != rows:
        x = jnp.pad(x, ((0, rows_pad - rows), (0, 0)))

    out = pl.pallas_call(
        fused_fft_conv_kernel,
        out_shape=jax.ShapeDtypeStruct((rows_pad, H * W), jnp.float32),
        grid=(rows_pad // TB,),
        in_specs=[
            pl.BlockSpec((TB, H * W), lambda i: (i, 0)),       # image rows
            pl.BlockSpec((H * W, H * W), lambda i: (0, 0)),    # fused operator
        ],
        out_specs=pl.BlockSpec((TB, H * W), lambda i: (i, 0)),
        compiler_params=pltpu.CompilerParams(
            dimension_semantics=("parallel",)),
    )(x, M)

    out = out[:rows].reshape(b, c, H, W)
    out = out[:, :,
              H // 2 - img_h // 2:H // 2 + img_h // 2,
              W // 2 - img_w // 2:W // 2 + img_w // 2]
    return out


# --------------------------- pure-JAX reference -------------------------------

def ref_forward(img, wiener_crop, mask, normalizer, args):
    H, W = args["psf_height"], args["psf_width"]
    cx, cy = args["psf_crop_size_x"], args["psf_crop_size_y"]
    img_h, img_w = args["image_height"], args["image_width"]
    pad_x, pad_y = H - cx, W - cy
    fft_layer = jnp.pad(wiener_crop,
                        ((pad_x // 2, pad_x // 2), (pad_y // 2, pad_y // 2)))
    for dim in range(2):
        fft_layer = jnp.roll(fft_layer, -(fft_layer.shape[dim] // 2), axis=dim)
    x = 0.5 * img + 0.5
    b, c, h, w = x.shape
    x = x[:, :, (h - cx) // 2:(h + cx) // 2, (w - cy) // 2:(w + cy) // 2]
    x = jnp.pad(x, ((0, 0), (0, 0),
                    (pad_x // 2, pad_x // 2), (pad_y // 2, pad_y // 2)))
    x = x * mask
    out = jnp.fft.ifft2(jnp.fft.fft2(x) * jnp.fft.fft2(fft_layer)[None, None]).real
    out = out * normalizer
    return out[:, :,
               H // 2 - img_h // 2:H // 2 + img_h // 2,
               W // 2 - img_w // 2:W // 2 + img_w // 2]


# ----------------------------------- main -------------------------------------

if __name__ == "__main__":
    args = dict(
        psf_height=16, psf_width=16,
        psf_crop_size_x=8, psf_crop_size_y=8,
        psf_centre_x=12, psf_centre_y=12,
        fft_gamma=20000.0,
        image_height=8, image_width=8,
        use_mask=True,
    )

    key = jax.random.PRNGKey(0)
    k_psf, k_mask, k_img = jax.random.split(key, 3)

    # Deterministic synthetic PSF (replaces np.load(args.psf_mat)).
    psf = jax.random.uniform(k_psf, (24, 24), jnp.float32)
    top = args["psf_centre_x"] - args["psf_crop_size_x"] // 2
    bottom = args["psf_centre_x"] + args["psf_crop_size_x"] // 2
    left = args["psf_centre_y"] - args["psf_crop_size_y"] // 2
    right = args["psf_centre_y"] + args["psf_crop_size_y"] // 2
    psf_crop = psf[top:bottom, left:right]

    wiener_crop = get_wiener_matrix(psf_crop, gamma=args["fft_gamma"],
                                    centre_roll=False)
    normalizer = 1.0 / 0.0008
    # Deterministic synthetic mask (replaces np.load(args.mask_path)).
    mask = jax.random.uniform(k_mask, (args["psf_height"], args["psf_width"]),
                              jnp.float32)
    img = jax.random.uniform(k_img, (2, 3, 16, 16), jnp.float32,
                             minval=-1.0, maxval=1.0)

    out = fft_layer_forward(img, wiener_crop, mask, normalizer, args)
    out = jax.block_until_ready(out)

    ref = ref_forward(img, wiener_crop, mask, normalizer, args)
    np.testing.assert_allclose(np.asarray(out), np.asarray(ref),
                               rtol=2e-2, atol=2e-3)
    print("KERNEL_OK")
</pallas_src>

<mosaic_0001>
module attributes {stable_mosaic.version = 11 : i64} {
  func.func @fused_fft_conv_kernel(%arg0: i32, %arg1: memref<8x256xf32, #tpu.memory_space<vmem>>, %arg2: memref<256x256xf32, #tpu.memory_space<vmem>>, %arg3: memref<8x256xf32, #tpu.memory_space<vmem>>) attributes {dimension_semantics = [#tpu.dimension_semantics<parallel>], iteration_bounds = array<i64: 1>, scalar_prefetch = 0 : i64, scratch_operands = 0 : i64, tpu.core_type = #tpu.core_type<tc>, window_params = [{transform_indices = @transform_0, window_bounds = array<i64: 8, 256>}, {pipeline_mode = #tpu.pipeline_mode<synchronous>, transform_indices = @transform_1, window_bounds = array<i64: 256, 256>}, {transform_indices = @transform_2, window_bounds = array<i64: 8, 256>}]} {
    %c0 = arith.constant 0 : index
    %c0_0 = arith.constant 0 : index
    %0 = vector.load %arg1[%c0, %c0_0] : memref<8x256xf32, #tpu.memory_space<vmem>>, vector<8x256xf32>
    %c0_1 = arith.constant 0 : index
    %c0_2 = arith.constant 0 : index
    %1 = vector.load %arg2[%c0_1, %c0_2] : memref<256x256xf32, #tpu.memory_space<vmem>>, vector<256x256xf32>
    %cst = arith.constant dense<0.000000e+00> : vector<8x256xf32>
    %2 = tpu.matmul %0, %1, %cst {dimension_numbers = #tpu.dot_dimension_numbers<[1], [0], [0], [1], [0, 0, 1, 1], [], []>} : vector<8x256xf32>, vector<256x256xf32>, vector<8x256xf32> -> vector<8x256xf32>
    %c0_3 = arith.constant 0 : index
    %c0_4 = arith.constant 0 : index
    %3 = vector.load %arg3[%c0_3, %c0_4] : memref<8x256xf32, #tpu.memory_space<vmem>>, vector<8x256xf32>
    tpu.vector_store %arg3[%c0_3, %c0_4], %2 {strides = array<i32>} : memref<8x256xf32, #tpu.memory_space<vmem>>, vector<8x256xf32>,
    return
  }
  func.func @transform_0(%arg0: i32) -> (i32, i32) {
    %c0_i32 = arith.constant 0 : i32
    %c0_i32_0 = arith.constant 0 : i32
    return %arg0, %c0_i32 : i32, i32
  }
  func.func @transform_1(%arg0: i32) -> (i32, i32) {
    %c0_i32 = arith.constant 0 : i32
    %c0_i32_0 = arith.constant 0 : i32
    %c0_i32_1 = arith.constant 0 : i32
    return %c0_i32, %c0_i32_0 : i32, i32
  }
  func.func @transform_2(%arg0: i32) -> (i32, i32) {
    %c0_i32 = arith.constant 0 : i32
    %c0_i32_0 = arith.constant 0 : i32
    return %arg0, %c0_i32 : i32, i32
  }
}

</mosaic_0001>

<llo_original>
// kernel: tpu_custom_call.1
$region0: #{tpu_custom_call.1}
  #allocation0 [shape = 'u32[]', space=smem, size = 0x4, offset = 0x4, fixed_abs, tag = 'smem constant byte address 0x4 - core index']
  #allocation1 [shape = 'u32[144,128]{1,0:T(1,128)}', space=vmem, size = 0x12000, scoped, tag = 'internal scratch']
  %s0 = inlined_call_operand.hbm [shape: f32[8,256], index: 0, kind: input, shape index: {}]
  %s1 = inlined_call_operand.hbm [shape: f32[256,256], index: 1, kind: input, shape index: {}]
  %s2 = inlined_call_operand.hbm [shape: f32[8,256], index: 2, kind: output, shape index: {}]
  %s3 = sld [smem:[#allocation0]]
  $region26: #{tpu_custom_call.1} parent=0
    _
  %s5 = ssub.s32 1, %s3
  %s6 = scalar_select 0, %s5, %s3
  $region1: #{tpu_custom_call.1} parent=0
    #allocation2 [shape = 'u8[8192]{0}', space=vmem, size = 0x2000, scoped, tag = 'input window, operand 0, single buffered']
    #allocation3 [shape = 's32[1]{0}', space=sflag, size = 0x4, scoped, tag = 'scoped memory for tpu_custom_call.1']
    #allocation4 [shape = 's32[1]{0}', space=sflag, size = 0x4, scoped, tag = 'scoped memory for tpu_custom_call.1']
    #allocation5 [shape = 'u8[262144]{0}', space=vmem, size = 0x40000, scoped, tag = 'input window, operand 1, single buffered']
    #allocation6 [shape = 's32[1]{0}', space=sflag, size = 0x4, scoped, tag = 'scoped memory for tpu_custom_call.1']
    #allocation7 [shape = 'u8[8192]{0}', space=vmem, size = 0x2000, scoped, tag = 'output window, operand 0, single buffered']
    %7 = vsyncpa [#allocation3], 0
    %8 = vsyncpa [#allocation6], 0
    %9 = vsyncpa [#allocation4], 0
    // Predicated region
    $region2: #{tpu_custom_call.1} parent=1 // pred_check
      _
    $region3: #{tpu_custom_call.1} parent=1 // pred_check_branch
      %11 = sbr.rel (0) target = $region5
    $region4: #{tpu_custom_call.1} parent=1 // pred_region
      %s13 = ssub.s32 256, 256
      %14 = vsyncadd [#allocation3], %s13
      %s16 = sshll.u32 [#allocation2], 4
      %s17 = int_to_ptr.vmem [resolvable:$true] %s16
      %19 = dma.hbm_to_vmem [thread:$0]  %s0, 256, %s17, [#allocation3]
    $region5: #{tpu_custom_call.1} parent=1 // pred_fallthru
      _
    // Predicated region
    $region6: #{tpu_custom_call.1} parent=1 // pred_check
      _
    $region7: #{tpu_custom_call.1} parent=1 // pred_check_branch
      %21 = sbr.rel (0) target = $region9
    $region8: #{tpu_custom_call.1} parent=1 // pred_region
      %s23 = ssub.s32 8192, 8192
      %24 = vsyncadd [#allocation6], %s23
      %s25 = sshll.u32 [#allocation5], 4
      %s26 = int_to_ptr.vmem [resolvable:$true] %s25
      %31 = dma.hbm_to_vmem [thread:$0]  %s1, 8192, %s26, [#allocation6], 256, 256, 16
    $region9: #{tpu_custom_call.1} parent=1 // pred_fallthru
      _
    // Predicated region
    $region10: #{tpu_custom_call.1} parent=1 // pred_check
      _
    $region11: #{tpu_custom_call.1} parent=1 // pred_check_branch
      %33 = sbr.rel (0) target = $region13
    $region12: #{tpu_custom_call.1} parent=1 // pred_region
      %34 = dma.done [#allocation3], 256
    $region13: #{tpu_custom_call.1} parent=1 // pred_fallthru
      _
    // Predicated region
    $region14: #{tpu_custom_call.1} parent=1 // pred_check
      _
    $region15: #{tpu_custom_call.1} parent=1 // pred_check_branch
      %36 = sbr.rel (0) target = $region17
    $region16: #{tpu_custom_call.1} parent=1 // pred_region
      %37 = dma.done [#allocation6], 8192
    $region17: #{tpu_custom_call.1} parent=1 // pred_fallthru
      _
    %v38 = vld [vmem:[#allocation2] sm:$0xff]
    %v39 = vld [vmem:[#allocation2 + $0x8] sm:$0xff]
    %v40 = vld [vmem:[#allocation5] sm:$0xff]
    %v41 = vld [vmem:[#allocation5 + $0x8] sm:$0xff]
    %v42 = vld [vmem:[#allocation5 + $0x10] sm:$0xff]
    %v43 = vld [vmem:[#allocation5 + $0x18] sm:$0xff]
    %v44 = vld [vmem:[#allocation5 + $0x20] sm:$0xff]
    %v45 = vld [vmem:[#allocation5 + $0x28] sm:$0xff]
    %v46 = vld [vmem:[#allocation5 + $0x30] sm:$0xff]
    %v47 = vld [vmem:[#allocation5 + $0x38] sm:$0xff]
    %v48 = vld [vmem:[#allocation5 + $0x40] sm:$0xff]
    %v49 = vld [vmem:[#allocation5 + $0x48] sm:$0xff]
    %v50 = vld [vmem:[#allocation5 + $0x50] sm:$0xff]
    %v51 = vld [vmem:[#allocation5 + $0x58] sm:$0xff]
    %v52 = vld [vmem:[#allocation5 + $0x60] sm:$0xff]
    %v53 = vld [vmem:[#allocation5 + $0x68] sm:$0xff]
    %v54 = vld [vmem:[#allocation5 + $0x70] sm:$0xff]
    %v55 = vld [vmem:[#allocation5 + $0x78] sm:$0xff]
    %v56 = vld [vmem:[#allocation5 + $0x80] sm:$0xff]
    %v57 = vld [vmem:[#allocation5 + $0x88] sm:$0xff]
    %v58 = vld [vmem:[#allocation5 + $0x90] sm:$0xff]
    %v59 = vld [vmem:[#allocation5 + $0x98] sm:$0xff]
    %v60 = vld [vmem:[#allocation5 + $0xa0] sm:$0xff]
    %v61 = vld [vmem:[#allocation5 + $0xa8] sm:$0xff]
    %v62 = vld [vmem:[#allocation5 + $0xb0] sm:$0xff]
    %v63 = vld [vmem:[#allocation5 + $0xb8] sm:$0xff]
    %v64 = vld [vmem:[#allocation5 + $0xc0] sm:$0xff]
    %v65 = vld [vmem:[#allocation5 + $0xc8] sm:$0xff]
    %v66 = vld [vmem:[#allocation5 + $0xd0] sm:$0xff]
    %v67 = vld [vmem:[#allocation5 + $0xd8] sm:$0xff]
    %v68 = vld [vmem:[#allocation5 + $0xe0] sm:$0xff]
    %v69 = vld [vmem:[#allocation5 + $0xe8] sm:$0xff]
    %v70 = vld [vmem:[#allocation5 + $0xf0] sm:$0xff]
    %v71 = vld [vmem:[#allocation5 + $0xf8] sm:$0xff]
    %v72 = vld [vmem:[#allocation5 + $0x100] sm:$0xff]
    %v73 = vld [vmem:[#allocation5 + $0x108] sm:$0xff]
    %v74 = vld [vmem:[#allocation5 + $0x110] sm:$0xff]
    %v75 = vld [vmem:[#allocation5 + $0x118] sm:$0xff]
    %v76 = vld [vmem:[#allocation5 + $0x120] sm:$0xff]
    %v77 = vld [vmem:[#allocation5 + $0x128] sm:$0xff]
    %v78 = vld [vmem:[#allocation5 + $0x130] sm:$0xff]
    %v79 = vld [vmem:[#allocation5 + $0x138] sm:$0xff]
    %v80 = vld [vmem:[#allocation5 + $0x140] sm:$0xff]
    %v81 = vld [vmem:[#allocation5 + $0x148] sm:$0xff]
    %v82 = vld [vmem:[#allocation5 + $0x150] sm:$0xff]
    %v83 = vld [vmem:[#allocation5 + $0x158] sm:$0xff]
    %v84 = vld [vmem:[#allocation5 + $0x160] sm:$0xff]
    %v85 = vld [vmem:[#allocation5 + $0x168] sm:$0xff]
    %v86 = vld [vmem:[#allocation5 + $0x170] sm:$0xff]
    %v87 = vld [vmem:[#allocation5 + $0x178] sm:$0xff]
    %v88 = vld [vmem:[#allocation5 + $0x180] sm:$0xff]
    %v89 = vld [vmem:[#allocation5 + $0x188] sm:$0xff]
    %v90 = vld [vmem:[#allocation5 + $0x190] sm:$0xff]
    %v91 = vld [vmem:[#allocation5 + $0x198] sm:$0xff]
    %v92 = vld [vmem:[#allocation5 + $0x1a0] sm:$0xff]
    %v93 = vld [vmem:[#allocation5 + $0x1a8] sm:$0xff]
    %v94 = vld [vmem:[#allocation5 + $0x1b0] sm:$0xff]
    %v95 = vld [vmem:[#allocation5 + $0x1b8] sm:$0xff]
    %v96 = vld [vmem:[#allocation5 + $0x1c0] sm:$0xff]
    %v97 = vld [vmem:[#allocation5 + $0x1c8] sm:$0xff]
    %v98 = vld [vmem:[#allocation5 + $0x1d0] sm:$0xff]
    %v99 = vld [vmem:[#allocation5 + $0x1d8] sm:$0xff]
    %v100 = vld [vmem:[#allocation5 + $0x1e0] sm:$0xff]
    %v101 = vld [vmem:[#allocation5 + $0x1e8] sm:$0xff]
    %v102 = vld [vmem:[#allocation5 + $0x1f0] sm:$0xff]
    %v103 = vld [vmem:[#allocation5 + $0x1f8] sm:$0xff]
    %104 = vmatprep.subr.mxu0 %v41
    %105 = vmatpush1.msra.mxu0 %v40
    %106 = vmatprep.subr.mxu0 %v43
    %107 = vmatpush1.msra.mxu0 %v42
    %108 = vmatprep.subr.mxu0 %v45
    %109 = vmatpush1.msra.mxu0 %v44
    %110 = vmatprep.subr.mxu0 %v47
    %111 = vmatpush1.msra.mxu0 %v46
    %112 = vmatprep.subr.mxu0 %v49
    %113 = vmatpush1.msra.mxu0 %v48
    %114 = vmatprep.subr.mxu0 %v51
    %115 = vmatpush1.msra.mxu0 %v50
    %116 = vmatprep.subr.mxu0 %v53
    %117 = vmatpush1.msra.mxu0 %v52
    %118 = vmatprep.subr.mxu0 %v55
    %119 = vmatpush1.msra.mxu0 %v54
    %120 = vmatprep.subr.mxu0 %v57
    %121 = vmatpush1.msra.mxu0 %v56
    %122 = vmatprep.subr.mxu0 %v59
    %123 = vmatpush1.msra.mxu0 %v58
    %124 = vmatprep.subr.mxu0 %v61
    %125 = vmatpush1.msra.mxu0 %v60
    %126 = vmatprep.subr.mxu0 %v63
    %127 = vmatpush1.msra.mxu0 %v62
    %128 = vmatprep.subr.mxu0 %v65
    %129 = vmatpush1.msra.mxu0 %v64
    %130 = vmatprep.subr.mxu0 %v67
    %131 = vmatpush1.msra.mxu0 %v66
    %132 = vmatprep.subr.mxu0 %v69
    %133 = vmatpush1.msra.mxu0 %v68
    %134 = vmatprep.subr.mxu0 %v71
    %135 = vmatpush1.msra.mxu0 %v70
    %136 = vmatprep.subr.mxu0 %v73
    %137 = vmatpush1.msra.mxu0 %v72
    %138 = vmatprep.subr.mxu0 %v75
    %139 = vmatpush1.msra.mxu0 %v74
    %140 = vmatprep.subr.mxu0 %v77
    %141 = vmatpush1.msra.mxu0 %v76
    %142 = vmatprep.subr.mxu0 %v79
    %143 = vmatpush1.msra.mxu0 %v78
    %144 = vmatprep.subr.mxu0 %v81
    %145 = vmatpush1.msra.mxu0 %v80
    %146 = vmatprep.subr.mxu0 %v83
    %147 = vmatpush1.msra.mxu0 %v82
    %148 = vmatprep.subr.mxu0 %v85
    %149 = vmatpush1.msra.mxu0 %v84
    %150 = vmatprep.subr.mxu0 %v87
    %151 = vmatpush1.msra.mxu0 %v86
    %152 = vmatprep.subr.mxu0 %v89
    %153 = vmatpush1.msra.mxu0 %v88
    %154 = vmatprep.subr.mxu0 %v91
    %155 = vmatpush1.msra.mxu0 %v90
    %156 = vmatprep.subr.mxu0 %v93
    %157 = vmatpush1.msra.mxu0 %v92
    %158 = vmatprep.subr.mxu0 %v95
    %159 = vmatpush1.msra.mxu0 %v94
    %160 = vmatprep.subr.mxu0 %v97
    %161 = vmatpush1.msra.mxu0 %v96
    %162 = vmatprep.subr.mxu0 %v99
    %163 = vmatpush1.msra.mxu0 %v98
    %164 = vmatprep.subr.mxu0 %v101
    %165 = vmatpush1.msra.mxu0 %v100
    %166 = vmatprep.subr.mxu0 %v103
    %167 = vmatpush1.msra.mxu0 %v102
    %168 = vmatprep.mubr.f32.mxu0 %v39
    %169 = vmatmul.mubr.f32.gmra.mrb[0].mxu0 %v38
    %v170 = vpop.f32.mrb[0].mxu0
    %v171 = vadd.f32 0.0, %v170
    %v172 = vpop.f32.mrb[0].mxu0
    %v173 = vadd.f32 0.0, %v172
    %174 = vdwg.mxu0
    %175 = vst [vmem:[#allocation7] sm:$0xff] %v171
    %176 = vst [vmem:[#allocation7 + $0x8] sm:$0xff] %v173
    // Predicated region
    $region18: #{tpu_custom_call.1} parent=1 // pred_check
      _
    $region19: #{tpu_custom_call.1} parent=1 // pred_check_branch
      %178 = sbr.rel (0) target = $region21
    $region20: #{tpu_custom_call.1} parent=1 // pred_region
      %s180 = ssub.s32 256, 256
      %181 = vsyncadd [#allocation4], %s180
      %s183 = sshll.u32 [#allocation7], 4
      %s184 = int_to_ptr.vmem [resolvable:$true] %s183
      %186 = dma.vmem_to_hbm [thread:$0]  %s184, 256, %s2, [#allocation4]
    $region21: #{tpu_custom_call.1} parent=1 // pred_fallthru
      _
    // Predicated region
    $region22: #{tpu_custom_call.1} parent=1 // pred_check
      _
    $region23: #{tpu_custom_call.1} parent=1 // pred_check_branch
      %188 = sbr.rel (0) target = $region25
    $region24: #{tpu_custom_call.1} parent=1 // pred_region
      %189 = dma.done [#allocation4], 256
    $region25: #{tpu_custom_call.1} parent=1 // pred_fallthru
      _
    %190 = vsyncpa [#allocation3], 1
    %191 = vsyncpa [#allocation6], 1
    %192 = vsyncpa [#allocation4], 1

</llo_original>
